<compile_context>
chip_gen: v7x
topology: tpu7x:2x2x1
jax: 0.10.0
libtpu: 0.0.40
codegen_flags: <defaults>
</compile_context>

<pallas_src>
import functools

import jax
import jax.numpy as jnp
from jax.experimental import pallas as pl
from jax.experimental.pallas import tpu as pltpu


def _round_up(v, m):
    return ((v + m - 1) // m) * m


def _layernorm_kernel(x_ref, g_ref, b_ref, o_ref, *, eps, inv_c):
    # Works for both block layouts used by the wrapper:
    #   4D block (nb, C, rows, 128): C is an outer dim -> channel reduce = VPU adds
    #   3D block (nb, C, lanes):     C is the sublane dim -> channel reduce on XLU
    x = x_ref[...].astype(jnp.float32)
    mean = jnp.sum(x, axis=1, keepdims=True) * inv_c
    centered = x - mean
    var = jnp.sum(centered * centered, axis=1, keepdims=True) * inv_c   # unbiased=False
    inv = jax.lax.rsqrt(var + eps)                                      # EUP slot
    g = g_ref[...].astype(jnp.float32)
    b = b_ref[...].astype(jnp.float32)
    o_ref[...] = (centered * (inv * g) + b).astype(o_ref.dtype)


def layer_norm_nchw(x, g, b, eps=1e-5):
    """LayerNorm over the channel dim of an NCHW tensor (matches the torch module)."""
    N, C, H, W = x.shape
    HW = H * W
    itemsize = jnp.dtype(x.dtype).itemsize
    sublane_align = max(8, 32 // itemsize)        # dtype-native sublane tile

    # ---- VMEM budget (generation aware) --------------------------------------
    try:
        phys_vmem = int(pltpu.get_tpu_info().vmem_capacity_bytes)   # 128 MiB v5e/v6e, 64 MiB v7x
    except Exception:
        phys_vmem = 64 * 1024 * 1024                                 # conservative (v7x) floor
    vmem_limit = min((phys_vmem * 3) // 4, 96 * 1024 * 1024)
    # double-buffered in + out blocks in x.dtype plus ~4 live f32 temps per element
    bytes_per_elem = 4 * itemsize + 16
    budget = max(vmem_limit - (4 << 20), 8 << 20)
    elem_cap = (2 << 20) if phys_vmem >= 100 * 1024 * 1024 else (1 << 19)
    max_block_elems = min(budget // bytes_per_elem, elem_cap)

    # ---- layout selection: x stays a pure reshape (never padded/sliced) ------
    if HW % 128 == 0:
        x_in = x.reshape(N, C, HW // 128, 128)     # lane/sublane dense, C is an outer dim
        g_in = g.reshape(1, C, 1, 1)
        b_in = b.reshape(1, C, 1, 1)
        spatial = HW // 128                        # spatial units = sublane rows
        unit = 128                                 # elems per spatial unit
        spatial_align = sublane_align
        c_eff = C                                  # outer dim: no layout padding
        four_d = True
    else:
        x_in = x.reshape(N, C, HW)                 # C on sublanes; ragged lane tail masked by Pallas
        g_in = g.reshape(1, C, 1)
        b_in = b.reshape(1, C, 1)
        spatial = HW                               # spatial units = lanes
        unit = 1
        spatial_align = 128
        c_eff = _round_up(C, sublane_align)        # sublane padding in VMEM
        four_d = False

    # ---- large-C guard --------------------------------------------------------
    max_units = max_block_elems // (c_eff * unit)
    if min(spatial, spatial_align) > max_units:
        # TODO(synk): tile C onto a third grid axis with a sum / sum-of-squares combine.
        raise ValueError(
            f"LayerNorm block for C={C} exceeds the VMEM budget; channel tiling not implemented.")

    # ---- balanced spatial tiling ----------------------------------------------
    if spatial <= max_units:
        spatial_block = spatial                    # whole image in one block (full extent is legal)
        grid_s = 1
    else:
        max_units_aligned = (max_units // spatial_align) * spatial_align
        grid_s = pl.cdiv(spatial, max_units_aligned)
        spatial_block = _round_up(pl.cdiv(spatial, grid_s), spatial_align)
        grid_s = pl.cdiv(spatial, spatial_block)   # ragged last block is masked by Pallas

    # ---- batch folding when a whole image is a small block --------------------
    nb = 1
    if grid_s == 1 and N > 1:
        max_nb = max(1, max_block_elems // (c_eff * unit * spatial_block))
        nb = min(max_nb, N)
        while N % nb:
            nb -= 1

    # ---- guarantee >= 2 grid steps so v7x megacore can use both TensorCores ---
    if (N // nb) * grid_s == 1:
        if spatial > spatial_align:
            spatial_block = _round_up(pl.cdiv(spatial, 2), spatial_align)
            grid_s = pl.cdiv(spatial, spatial_block)
        elif nb > 1:
            nb2 = nb // 2
            while nb2 > 1 and N % nb2:
                nb2 -= 1
            nb = max(1, nb2)

    grid = (N // nb, grid_s)

    if four_d:
        block = (nb, C, spatial_block, 128)
        idx = lambda n, t: (n, 0, t, 0)
        pblock = (1, C, 1, 1)
        pidx = lambda n, t: (0, 0, 0, 0)
    else:
        block = (nb, C, spatial_block)
        idx = lambda n, t: (n, 0, t)
        pblock = (1, C, 1)
        pidx = lambda n, t: (0, 0, 0)

    cost = pl.CostEstimate(
        flops=7 * N * C * HW,
        transcendentals=N * HW,
        bytes_accessed=2 * N * C * HW * itemsize + 2 * C * 4,
    )

    out = pl.pallas_call(
        functools.partial(_layernorm_kernel, eps=float(eps), inv_c=1.0 / C),
        out_shape=jax.ShapeDtypeStruct(x_in.shape, x.dtype),
        grid_spec=pltpu.PrefetchScalarGridSpec(
            num_scalar_prefetch=0,
            grid=grid,
            in_specs=[
                pl.BlockSpec(block, idx),
                pl.BlockSpec(pblock, pidx),
                pl.BlockSpec(pblock, pidx),
            ],
            out_specs=pl.BlockSpec(block, idx),
        ),
        compiler_params=pltpu.CompilerParams(
            dimension_semantics=("parallel", "parallel"),
            vmem_limit_bytes=int(vmem_limit),
        ),
        cost_estimate=cost,
    )(x_in, g_in, b_in)

    return out.reshape(N, C, H, W)


def layer_norm_reference(x, g, b, eps=1e-5):
    xf = x.astype(jnp.float32)
    mean = jnp.mean(xf, axis=1, keepdims=True)
    var = jnp.mean((xf - mean) ** 2, axis=1, keepdims=True)
    return ((xf - mean) / jnp.sqrt(var + eps) * g + b).astype(x.dtype)


if __name__ == "__main__":
    ln = jax.jit(layer_norm_nchw, static_argnames=("eps",))

    key = jax.random.PRNGKey(0)
    # Lane-aligned (H*W % 128 == 0) and ragged (H*W % 128 != 0) spatial shapes.
    for (N, C, H, W) in [(2, 4, 16, 16), (2, 4, 10, 10)]:
        key, sub = jax.random.split(key)
        x = jax.random.normal(sub, (N, C, H, W), dtype=jnp.float32)
        # nn.Parameter(torch.ones/zeros(1, dim, 1, 1))
        g = jnp.ones((1, C, 1, 1), dtype=jnp.float32)
        b = jnp.zeros((1, C, 1, 1), dtype=jnp.float32)

        out = jax.block_until_ready(ln(x, g, b, eps=1e-5))
        ref = layer_norm_reference(x, g, b, eps=1e-5)

        assert out.shape == (N, C, H, W)
        assert jnp.allclose(out, ref, atol=1e-5, rtol=1e-5), f"mismatch vs reference at {(N, C, H, W)}"

    print("KERNEL_OK")
</pallas_src>

<mosaic_0001>
module attributes {stable_mosaic.version = 11 : i64} {
  func.func @_layernorm_kernel(%arg0: i32, %arg1: i32, %arg2: memref<1x4x2x128xf32, #tpu.memory_space<vmem>>, %arg3: memref<1x4x1x1xf32, #tpu.memory_space<vmem>>, %arg4: memref<1x4x1x1xf32, #tpu.memory_space<vmem>>, %arg5: memref<1x4x2x128xf32, #tpu.memory_space<vmem>>) attributes {dimension_semantics = [#tpu.dimension_semantics<parallel>, #tpu.dimension_semantics<parallel>], iteration_bounds = array<i64: 2, 1>, scalar_prefetch = 0 : i64, scratch_operands = 0 : i64, tpu.core_type = #tpu.core_type<tc>, window_params = [{transform_indices = @transform_0, window_bounds = array<i64: 1, 4, 2, 128>}, {pipeline_mode = #tpu.pipeline_mode<synchronous>, transform_indices = @transform_1, window_bounds = array<i64: 1, 4, 1, 1>}, {pipeline_mode = #tpu.pipeline_mode<synchronous>, transform_indices = @transform_2, window_bounds = array<i64: 1, 4, 1, 1>}, {transform_indices = @transform_3, window_bounds = array<i64: 1, 4, 2, 128>}]} {
    %c0 = arith.constant 0 : index
    %c0_0 = arith.constant 0 : index
    %c0_1 = arith.constant 0 : index
    %c0_2 = arith.constant 0 : index
    %0 = vector.load %arg2[%c0, %c0_0, %c0_1, %c0_2] : memref<1x4x2x128xf32, #tpu.memory_space<vmem>>, vector<1x4x2x128xf32>
    %cst = arith.constant dense<0.000000e+00> : vector<1x2x128xf32>
    %1 = vector.multi_reduction <add>, %0, %cst [1] : vector<1x4x2x128xf32> to vector<1x2x128xf32>
    %2 = vector.shape_cast %1 : vector<1x2x128xf32> to vector<1x1x2x128xf32>
    %cst_3 = arith.constant 2.500000e-01 : f32
    %3 = vector.broadcast %cst_3 : f32 to vector<1x1x2x128xf32>
    %4 = arith.mulf %2, %3 : vector<1x1x2x128xf32>
    %5 = vector.broadcast %4 : vector<1x1x2x128xf32> to vector<1x4x2x128xf32>
    %6 = arith.subf %0, %5 : vector<1x4x2x128xf32>
    %7 = arith.mulf %6, %6 : vector<1x4x2x128xf32>
    %cst_4 = arith.constant dense<0.000000e+00> : vector<1x2x128xf32>
    %8 = vector.multi_reduction <add>, %7, %cst_4 [1] : vector<1x4x2x128xf32> to vector<1x2x128xf32>
    %9 = vector.shape_cast %8 : vector<1x2x128xf32> to vector<1x1x2x128xf32>
    %cst_5 = arith.constant 2.500000e-01 : f32
    %10 = vector.broadcast %cst_5 : f32 to vector<1x1x2x128xf32>
    %11 = arith.mulf %9, %10 : vector<1x1x2x128xf32>
    %cst_6 = arith.constant 9.99999974E-6 : f32
    %12 = vector.broadcast %cst_6 : f32 to vector<1x1x2x128xf32>
    %13 = arith.addf %11, %12 : vector<1x1x2x128xf32>
    %14 = math.rsqrt %13 : vector<1x1x2x128xf32>
    %c0_7 = arith.constant 0 : index
    %c0_8 = arith.constant 0 : index
    %c0_9 = arith.constant 0 : index
    %c0_10 = arith.constant 0 : index
    %15 = vector.load %arg3[%c0_7, %c0_8, %c0_9, %c0_10] : memref<1x4x1x1xf32, #tpu.memory_space<vmem>>, vector<1x4x1x1xf32>
    %c0_11 = arith.constant 0 : index
    %c0_12 = arith.constant 0 : index
    %c0_13 = arith.constant 0 : index
    %c0_14 = arith.constant 0 : index
    %16 = vector.load %arg4[%c0_11, %c0_12, %c0_13, %c0_14] : memref<1x4x1x1xf32, #tpu.memory_space<vmem>>, vector<1x4x1x1xf32>
    %17 = vector.broadcast %14 : vector<1x1x2x128xf32> to vector<1x4x2x128xf32>
    %18 = vector.broadcast %15 : vector<1x4x1x1xf32> to vector<1x4x2x128xf32>
    %19 = arith.mulf %17, %18 : vector<1x4x2x128xf32>
    %20 = arith.mulf %6, %19 : vector<1x4x2x128xf32>
    %21 = vector.broadcast %16 : vector<1x4x1x1xf32> to vector<1x4x2x128xf32>
    %22 = arith.addf %20, %21 : vector<1x4x2x128xf32>
    %c0_15 = arith.constant 0 : index
    %c0_16 = arith.constant 0 : index
    %c0_17 = arith.constant 0 : index
    %c0_18 = arith.constant 0 : index
    %23 = vector.load %arg5[%c0_15, %c0_16, %c0_17, %c0_18] : memref<1x4x2x128xf32, #tpu.memory_space<vmem>>, vector<1x4x2x128xf32>
    tpu.vector_store %arg5[%c0_15, %c0_16, %c0_17, %c0_18], %22 {strides = array<i32>} : memref<1x4x2x128xf32, #tpu.memory_space<vmem>>, vector<1x4x2x128xf32>,
    return
  }
  func.func @transform_0(%arg0: i32, %arg1: i32) -> (i32, i32, i32, i32) {
    %c0_i32 = arith.constant 0 : i32
    %c0_i32_0 = arith.constant 0 : i32
    %c0_i32_1 = arith.constant 0 : i32
    return %arg0, %c0_i32, %arg1, %c0_i32_0 : i32, i32, i32, i32
  }
  func.func @transform_1(%arg0: i32, %arg1: i32) -> (i32, i32, i32, i32) {
    %c0_i32 = arith.constant 0 : i32
    %c0_i32_0 = arith.constant 0 : i32
    %c0_i32_1 = arith.constant 0 : i32
    %c0_i32_2 = arith.constant 0 : i32
    %c0_i32_3 = arith.constant 0 : i32
    return %c0_i32, %c0_i32_0, %c0_i32_1, %c0_i32_2 : i32, i32, i32, i32
  }
  func.func @transform_2(%arg0: i32, %arg1: i32) -> (i32, i32, i32, i32) {
    %c0_i32 = arith.constant 0 : i32
    %c0_i32_0 = arith.constant 0 : i32
    %c0_i32_1 = arith.constant 0 : i32
    %c0_i32_2 = arith.constant 0 : i32
    %c0_i32_3 = arith.constant 0 : i32
    return %c0_i32, %c0_i32_0, %c0_i32_1, %c0_i32_2 : i32, i32, i32, i32
  }
  func.func @transform_3(%arg0: i32, %arg1: i32) -> (i32, i32, i32, i32) {
    %c0_i32 = arith.constant 0 : i32
    %c0_i32_0 = arith.constant 0 : i32
    %c0_i32_1 = arith.constant 0 : i32
    return %arg0, %c0_i32, %arg1, %c0_i32_0 : i32, i32, i32, i32
  }
}

</mosaic_0001>

<llo_original>
// kernel: layer_norm_nchw.1
$region0: #{layer_norm_nchw.1}
  #allocation0 [shape = 'u32[]', space=smem, size = 0x4, offset = 0x4, fixed_abs, tag = 'smem constant byte address 0x4 - core index']
  #allocation1 [shape = 'u32[144,128]{1,0:T(1,128)}', space=vmem, size = 0x12000, scoped, tag = 'internal scratch']
  %s0 = inlined_call_operand.vmem [shape: f32[2,4,2,128], index: 0, kind: input, shape index: {}]
  %s1 = inlined_call_operand.vmem [shape: f32[1,4,1,1], index: 1, kind: input, shape index: {}]
  %s2 = inlined_call_operand.vmem [shape: f32[1,4,1,1], index: 2, kind: input, shape index: {}]
  %s3 = inlined_call_operand.vmem [shape: f32[2,4,2,128], index: 3, kind: output, shape index: {}]
  %s4 = sld [smem:[#allocation0]]
  $region45: #{layer_norm_nchw.1} parent=0
    _
  %s6 = ssub.s32 1, %s4
  %s7 = scalar_select 0, %s6, %s4
  loop: start=0, step=1, limit=4
  $region2: #{layer_norm_nchw.1} parent=0 // loop_pre_header
    _
  $region3: #{layer_norm_nchw.1} parent=0 // loop_header
    %s9 = sphi 0, %s13
    %p10 = scmp.ge.s32.totalorder %s9, 4
    %s16 = sphi 0, %s28
    %s17 = sphi 0, %s24
    %s18 = sphi 0, %s16
    %s19 = sphi 0, %s17
    %s20 = sphi 0, %s18
    %s21 = sphi 0, %s19
    %s33 = sphi 0, %s35
    %s36 = sphi 0, %s33
    %s37 = sphi 0, %s36
    %s53 = sphi 0, %s37
    %s57 = sphi 0, %s57
    %s59 = sphi 0, %s57
    %s60 = sphi 0, %s59
    %s74 = sphi 0, %s60
    %s78 = sphi 0, %s78
    %s80 = sphi 0, %s78
    %s81 = sphi 0, %s80
    %s95 = sphi 0, %s81
    %s103 = sphi 0, %s105
    %s106 = sphi 0, %s103
    %s107 = sphi 0, %s106
    %s123 = sphi 0, %s107
  $region4: #{layer_norm_nchw.1} parent=0 // loop_header_branch
    %12 = sbr.rel (%p10) target = $region8
  $region5: #{layer_norm_nchw.1} parent=0 // loop_body
    %s14 = ssub.s32 %s9, 1
    %s15 = ssub.s32 %s9, 2
    %s22 = sadd.s32 1, %s17
    %p23 = scmp.ge.s32.totalorder %s22, 1
    %s24 = scalar_select %p23, 0, %s22
    %s25 = sadd.s32 1, %s16
    %s26 = scalar_select %p23, %s25, %s16
    %p27 = scmp.ge.s32.totalorder %s26, 2
    %s28 = scalar_select %p27, 0, %s26
    %s29 = ssub.s32 %s16, %s28
    %s30 = ssub.s32 %s17, %s24
    %s31 = sor.u32 %s29, %s30
    %p32 = scmp.eq.s32.totalorder %s31, 0
    %s34 = sadd.s32 %s33, 1
    %s35 = scalar_select %p32, %s33, %s34
    %p38 = pneg %p32
    %p39 = scmp.eq.s32.totalorder %s9, 1
    %p40 = por %p38, %p39
    %p41 = scmp.ne.s32.totalorder %s33, %s36
    %p42 = scmp.eq.s32.totalorder %s9, 0
    %p43 = por %p41, %p42
    %p44 = scmp.ne.s32.totalorder %s33, %s36
    %p45 = scmp.eq.s32.totalorder %s14, 1
    %p46 = por %p44, %p45
    %p47 = scmp.ne.s32.totalorder %s36, %s37
    %p48 = scmp.eq.s32.totalorder %s14, 0
    %p49 = por %p47, %p48
    %p50 = scmp.ne.s32.totalorder %s36, %s37
    %p51 = scmp.eq.s32.totalorder %s15, 1
    %p52 = por %p50, %p51
    %p54 = scmp.ne.s32.totalorder %s37, %s53
    %p55 = scmp.eq.s32.totalorder %s15, 0
    %p56 = por %p54, %p55
    %s58 = sadd.s32 %s57, 1
    %p61 = scmp.eq.s32.totalorder %s9, 1
    %p62 = scmp.ne.s32.totalorder %s57, %s59
    %p63 = scmp.eq.s32.totalorder %s9, 0
    %p64 = por %p62, %p63
    %p65 = scmp.ne.s32.totalorder %s57, %s59
    %p66 = scmp.eq.s32.totalorder %s14, 1
    %p67 = por %p65, %p66
    %p68 = scmp.ne.s32.totalorder %s59, %s60
    %p69 = scmp.eq.s32.totalorder %s14, 0
    %p70 = por %p68, %p69
    %p71 = scmp.ne.s32.totalorder %s59, %s60
    %p72 = scmp.eq.s32.totalorder %s15, 1
    %p73 = por %p71, %p72
    %p75 = scmp.ne.s32.totalorder %s60, %s74
    %p76 = scmp.eq.s32.totalorder %s15, 0
    %p77 = por %p75, %p76
    %s79 = sadd.s32 %s78, 1
    %p82 = scmp.eq.s32.totalorder %s9, 1
    %p83 = scmp.ne.s32.totalorder %s78, %s80
    %p84 = scmp.eq.s32.totalorder %s9, 0
    %p85 = por %p83, %p84
    %p86 = scmp.ne.s32.totalorder %s78, %s80
    %p87 = scmp.eq.s32.totalorder %s14, 1
    %p88 = por %p86, %p87
    %p89 = scmp.ne.s32.totalorder %s80, %s81
    %p90 = scmp.eq.s32.totalorder %s14, 0
    %p91 = por %p89, %p90
    %p92 = scmp.ne.s32.totalorder %s80, %s81
    %p93 = scmp.eq.s32.totalorder %s15, 1
    %p94 = por %p92, %p93
    %p96 = scmp.ne.s32.totalorder %s81, %s95
    %p97 = scmp.eq.s32.totalorder %s15, 0
    %p98 = por %p96, %p97
    %s99 = ssub.s32 %s16, %s28
    %s100 = ssub.s32 %s17, %s24
    %s101 = sor.u32 %s99, %s100
    %p102 = scmp.eq.s32.totalorder %s101, 0
    %s104 = sadd.s32 %s103, 1
    %s105 = scalar_select %p102, %s103, %s104
    %p108 = pneg %p102
    %p109 = scmp.eq.s32.totalorder %s9, 1
    %p110 = por %p108, %p109
    %p111 = scmp.ne.s32.totalorder %s103, %s106
    %p112 = scmp.eq.s32.totalorder %s9, 0
    %p113 = por %p111, %p112
    %p114 = scmp.ne.s32.totalorder %s103, %s106
    %p115 = scmp.eq.s32.totalorder %s14, 1
    %p116 = por %p114, %p115
    %p117 = scmp.ne.s32.totalorder %s106, %s107
    %p118 = scmp.eq.s32.totalorder %s14, 0
    %p119 = por %p117, %p118
    %p120 = scmp.ne.s32.totalorder %s106, %s107
    %p121 = scmp.eq.s32.totalorder %s15, 1
    %p122 = por %p120, %p121
    %p124 = scmp.ne.s32.totalorder %s107, %s123
    %p125 = scmp.eq.s32.totalorder %s15, 0
    %p126 = por %p124, %p125
    %p127 = scmp.le.s32.totalorder 1, %s9
    %p128 = scmp.lt.s32.totalorder %s9, 3
    %p129 = pnand %p127, %p128
    %p130 = pneg %p129
    // Predicated region
    $region9: #{layer_norm_nchw.1} parent=5 // pred_check
      _
    $region10: #{layer_norm_nchw.1} parent=5 // pred_check_branch
      %132 = sbr.rel (%p129) target = $region12
    $region11: #{layer_norm_nchw.1} parent=5 // pred_region
      %s133 = ssub.s32 %s9, 1
      // Predicated region
      $region13: #{layer_norm_nchw.1} parent=11 // pred_check
        %p134 = pneg %p70
      $region14: #{layer_norm_nchw.1} parent=11 // pred_check_branch
        %136 = sbr.rel (%p134) target = $region16
      $region15: #{layer_norm_nchw.1} parent=11 // pred_region
        _
      $region16: #{layer_norm_nchw.1} parent=11 // pred_fallthru
        _
      // Predicated region
      $region17: #{layer_norm_nchw.1} parent=11 // pred_check
        %p137 = pneg %p91
      $region18: #{layer_norm_nchw.1} parent=11 // pred_check_branch
        %139 = sbr.rel (%p137) target = $region20
      $region19: #{layer_norm_nchw.1} parent=11 // pred_region
        _
      $region20: #{layer_norm_nchw.1} parent=11 // pred_fallthru
        _
    $region12: #{layer_norm_nchw.1} parent=5 // pred_fallthru
      _
    %p140 = scmp.lt.s32.totalorder %s9, 2
    // Predicated region
    $region21: #{layer_norm_nchw.1} parent=5 // pred_check
      %p141 = pneg %p140
    $region22: #{layer_norm_nchw.1} parent=5 // pred_check_branch
      %143 = sbr.rel (%p141) target = $region24
    $region23: #{layer_norm_nchw.1} parent=5 // pred_region
      // Predicated region
      $region25: #{layer_norm_nchw.1} parent=23 // pred_check
        %p144 = pneg %p43
      $region26: #{layer_norm_nchw.1} parent=23 // pred_check_branch
        %146 = sbr.rel (%p144) target = $region28
      $region27: #{layer_norm_nchw.1} parent=23 // pred_region
        %p147 = scmp.lt.s32.totalorder %s16, 1
        %s148 = scalar_select %p147, %s16, 1
        %p149 = scmp.lt.s32.totalorder %s17, 0
        %s150 = scalar_select %p149, %s17, 0
        %s151 = smul.addr %s148, 4
        %s152 = sadd.s32 %s150, %s151
        %s153 = smul.addr %s152, 2
        %s154 = scalar_lea.vmem %s0, %s153
      $region28: #{layer_norm_nchw.1} parent=23 // pred_fallthru
        _
    $region24: #{layer_norm_nchw.1} parent=5 // pred_fallthru
      _
    %p155 = scmp.le.s32.totalorder 1, %s9
    %p156 = scmp.lt.s32.totalorder %s9, 3
    %p157 = pnand %p155, %p156
    %p158 = pneg %p157
    // Predicated region
    $region29: #{layer_norm_nchw.1} parent=5 // pred_check
      _
    $region30: #{layer_norm_nchw.1} parent=5 // pred_check_branch
      %160 = sbr.rel (%p157) target = $region32
    $region31: #{layer_norm_nchw.1} parent=5 // pred_region
      %s161 = ssub.s32 %s9, 1
      %p162 = scmp.lt.s32.totalorder %s18, 1
      %s163 = scalar_select %p162, %s18, 1
      %p164 = scmp.lt.s32.totalorder %s19, 0
      %s165 = scalar_select %p164, %s19, 0
      %s166 = smul.addr %s163, 4
      %s167 = sadd.s32 %s165, %s166
      %s168 = smul.addr %s167, 2
      %s169 = scalar_lea.vmem %s0, %s168
      %p170 = pneg %p49
      %p171 = pneg %p46
      %p172 = pneg %p70
      %p173 = pneg %p67
      %p174 = pneg %p91
      %p175 = pneg %p88
      %p176 = pneg %p119
      %p177 = pneg %p116
      %p178 = scmp.lt.s32.totalorder %s18, 1
      %s179 = scalar_select %p178, %s18, 1
      %p180 = scmp.lt.s32.totalorder %s19, 0
      %s181 = scalar_select %p180, %s19, 0
      %s182 = smul.addr %s179, 4
      %s183 = sadd.s32 %s181, %s182
      %s184 = smul.addr %s183, 2
      %s185 = scalar_lea.vmem %s3, %s184
      %p186 = scmp.lt.s32.totalorder %s18, 1
      %s187 = scalar_select %p186, %s18, 1
      %p188 = scmp.lt.s32.totalorder %s19, 0
      %s189 = scalar_select %p188, %s19, 0
      %s190 = smul.addr %s187, 4
      %s191 = sadd.s32 %s189, %s190
      %s192 = smul.addr %s191, 2
      %s193 = scalar_lea.vmem %s0, %s192
      %p194 = scmp.lt.s32.totalorder %s18, 1
      %s195 = scalar_select %p194, %s18, 1
      %p196 = scmp.lt.s32.totalorder %s19, 0
      %s197 = scalar_select %p196, %s19, 0
      %s198 = smul.addr %s195, 4
      %s199 = sadd.s32 %s197, %s198
      %s200 = smul.addr %s199, 2
      %s201 = scalar_lea.vmem %s3, %s200
      %v202 = vld [vmem:[%s193] sm:$0x3]
      %v203 = vld [vmem:[%s193 + $0x2] sm:$0x3]
      %v204 = vld [vmem:[%s193 + $0x4] sm:$0x3]
      %v205 = vld [vmem:[%s193 + $0x6] sm:$0x3]
      %vm206 = vcmask 1041408
      %v207 = vsel %vm206, %v202, 0.0
      %v208 = vsel %vm206, %v203, 0.0
      %v209 = vadd.f32 %v207, %v208
      %v210 = vsel %vm206, %v204, 0.0
      %v211 = vadd.f32 %v209, %v210
      %v212 = vsel %vm206, %v205, 0.0
      %v213 = vadd.f32 %v211, %v212
      %v214 = vmul.f32 %v213, 0.25
      %v215 = vsub.f32 %v202, %v214
      %v216 = vsub.f32 %v203, %v214
      %v217 = vsub.f32 %v204, %v214
      %v218 = vsub.f32 %v205, %v214
      %v219 = vmul.f32 %v215, %v215
      %v220 = vmul.f32 %v216, %v216
      %v221 = vmul.f32 %v217, %v217
      %v222 = vmul.f32 %v218, %v218
      %v223 = vsel %vm206, %v219, 0.0
      %v224 = vsel %vm206, %v220, 0.0
      %v225 = vadd.f32 %v223, %v224
      %v226 = vsel %vm206, %v221, 0.0
      %v227 = vadd.f32 %v225, %v226
      %v228 = vsel %vm206, %v222, 0.0
      %v229 = vadd.f32 %v227, %v228
      %v230 = vmul.f32 %v229, 0.25
      %v231 = vadd.f32 %v230, 1e-05
      %v232 = vrsqrt.pop %v231
      %v233 = vld [vmem:[%s1] sm:$0x1]
      %v234 = vld [vmem:[%s1 + $0x1] sm:$0x1]
      %v235 = vld [vmem:[%s1 + $0x2] sm:$0x1]
      %v236 = vld [vmem:[%s1 + $0x3] sm:$0x1]
      %v237 = vld [vmem:[%s2] sm:$0x1]
      %v238 = vld [vmem:[%s2 + $0x1] sm:$0x1]
      %v239 = vld [vmem:[%s2 + $0x2] sm:$0x1]
      %v240 = vld [vmem:[%s2 + $0x3] sm:$0x1]
      %v245 = vlaneseq
      %v246 = vshrl.u32 %v245, 7
      %v247 = vsub.s32 0, %v246
      %v248 = vrot.slane %v233, %v247
      %v249 = vlaneseq
      %v250 = vshrl.u32 %v249, 7
      %v251 = vsub.s32 0, %v250
      %v252 = vrot.slane %v234, %v251
      %v253 = vlaneseq
      %v254 = vshrl.u32 %v253, 7
      %v255 = vsub.s32 0, %v254
      %v256 = vrot.slane %v235, %v255
      %v257 = vlaneseq
      %v258 = vshrl.u32 %v257, 7
      %v259 = vsub.s32 0, %v258
      %v260 = vrot.slane %v236, %v259
      %261 = vset.pattern.permute.xlu0 0
      %262 = vperm.xlu0 %261, %v248
      %v263 = vpop.permute.xlu0 %262
      %265 = vset.pattern.permute.xlu0 0
      %266 = vperm.xlu0 %265, %v252
      %v267 = vpop.permute.xlu0 %266
      %269 = vset.pattern.permute.xlu0 0
      %270 = vperm.xlu0 %269, %v256
      %v271 = vpop.permute.xlu0 %270
      %273 = vset.pattern.permute.xlu0 0
      %274 = vperm.xlu0 %273, %v260
      %v275 = vpop.permute.xlu0 %274
      %v277 = vmul.f32 %v232, %v263
      %v278 = vmul.f32 %v232, %v267
      %v279 = vmul.f32 %v232, %v271
      %v280 = vmul.f32 %v232, %v275
      %v281 = vmul.f32 %v215, %v277
      %v282 = vmul.f32 %v216, %v278
      %v283 = vmul.f32 %v217, %v279
      %v284 = vmul.f32 %v218, %v280
      %v289 = vlaneseq
      %v290 = vshrl.u32 %v289, 7
      %v291 = vsub.s32 0, %v290
      %v292 = vrot.slane %v237, %v291
      %v293 = vlaneseq
      %v294 = vshrl.u32 %v293, 7
      %v295 = vsub.s32 0, %v294
      %v296 = vrot.slane %v238, %v295
      %v297 = vlaneseq
      %v298 = vshrl.u32 %v297, 7
      %v299 = vsub.s32 0, %v298
      %v300 = vrot.slane %v239, %v299
      %v301 = vlaneseq
      %v302 = vshrl.u32 %v301, 7
      %v303 = vsub.s32 0, %v302
      %v304 = vrot.slane %v240, %v303
      %305 = vset.pattern.permute.xlu0 0
      %306 = vperm.xlu0 %305, %v292
      %v307 = vpop.permute.xlu0 %306
      %309 = vset.pattern.permute.xlu0 0
      %310 = vperm.xlu0 %309, %v296
      %v311 = vpop.permute.xlu0 %310
      %313 = vset.pattern.permute.xlu0 0
      %314 = vperm.xlu0 %313, %v300
      %v315 = vpop.permute.xlu0 %314
      %317 = vset.pattern.permute.xlu0 0
      %318 = vperm.xlu0 %317, %v304
      %v319 = vpop.permute.xlu0 %318
      %v321 = vadd.f32 %v281, %v307
      %v322 = vadd.f32 %v282, %v311
      %v323 = vadd.f32 %v283, %v315
      %v324 = vadd.f32 %v284, %v319
      %325 = vst [vmem:[%s201] sm:$0x3] %v321
      %326 = vst [vmem:[%s201 + $0x2] sm:$0x3] %v322
      %327 = vst [vmem:[%s201 + $0x4] sm:$0x3] %v323
      %328 = vst [vmem:[%s201 + $0x6] sm:$0x3] %v324
      %p329 = scmp.lt.s32.totalorder %s18, 1
      %s330 = scalar_select %p329, %s18, 1
      %p331 = scmp.lt.s32.totalorder %s19, 0
      %s332 = scalar_select %p331, %s19, 0
      %s333 = smul.addr %s330, 4
      %s334 = sadd.s32 %s332, %s333
      %s335 = smul.addr %s334, 2
      %s336 = scalar_lea.vmem %s3, %s335
      // Predicated region
      $region33: #{layer_norm_nchw.1} parent=31 // pred_check
        %p337 = pneg %p116
      $region34: #{layer_norm_nchw.1} parent=31 // pred_check_branch
        %339 = sbr.rel (%p337) target = $region36
      $region35: #{layer_norm_nchw.1} parent=31 // pred_region
        _
      $region36: #{layer_norm_nchw.1} parent=31 // pred_fallthru
        _
    $region32: #{layer_norm_nchw.1} parent=5 // pred_fallthru
      _
    %p340 = scmp.le.s32.totalorder 2, %s9
    // Predicated region
    $region37: #{layer_norm_nchw.1} parent=5 // pred_check
      %p341 = pneg %p340
    $region38: #{layer_norm_nchw.1} parent=5 // pred_check_branch
      %343 = sbr.rel (%p341) target = $region40
    $region39: #{layer_norm_nchw.1} parent=5 // pred_region
      %s344 = ssub.s32 %s9, 2
      // Predicated region
      $region41: #{layer_norm_nchw.1} parent=39 // pred_check
        %p345 = pneg %p122
      $region42: #{layer_norm_nchw.1} parent=39 // pred_check_branch
        %347 = sbr.rel (%p345) target = $region44
      $region43: #{layer_norm_nchw.1} parent=39 // pred_region
        %p348 = scmp.lt.s32.totalorder %s20, 1
        %s349 = scalar_select %p348, %s20, 1
        %p350 = scmp.lt.s32.totalorder %s21, 0
        %s351 = scalar_select %p350, %s21, 0
        %s352 = smul.addr %s349, 4
        %s353 = sadd.s32 %s351, %s352
        %s354 = smul.addr %s353, 2
        %s355 = scalar_lea.vmem %s3, %s354
      $region44: #{layer_norm_nchw.1} parent=39 // pred_fallthru
        _
    $region40: #{layer_norm_nchw.1} parent=5 // pred_fallthru
      _
  $region6: #{layer_norm_nchw.1} parent=0 // loop_footer
    %s13 = sadd.s32 1, %s9
  $region7: #{layer_norm_nchw.1} parent=0 // loop_footer_branch
    %8 = sbr.rel target = $region3
  $region8: #{layer_norm_nchw.1} parent=0 // loop_exit
    _

</llo_original>
